<compile_context>
chip_gen: v7x
topology: tpu7x:2x2x1
jax: 0.10.0
libtpu: 0.0.40
codegen_flags: <defaults>
</compile_context>

<pallas_src>
import functools

import jax
import jax.numpy as jnp
from jax.experimental import pallas as pl
from jax.experimental.pallas import tpu as pltpu


def _attention_kernel(x_ref, w_ref, b_ref, out_ref, wts_ref, *, flat_scores):
    # x_ref:   (TB, S, H)  VMEM   -- TB batch rows (TB % 8 == 0)
    # w_ref:   (H, 1) VMEM [flat path]  or  (1, H) VMEM [fallback path]
    # b_ref:   (1, 1)      SMEM   -- linear bias (scalar)
    # out_ref: (TB, H)     VMEM
    # wts_ref: (TB, S)     VMEM
    x = x_ref[...]
    TB, S, H = x.shape
    b = b_ref[0, 0]

    # ---- attention scores: the big x block is never transposed/relaid out ----
    if flat_scores:
        # Flat MXU matmul (M = TB*S, K = H, N = 1).  K sits on the lanes of the
        # LHS and on the sublanes of the (H, 1) RHS -> natural MXU layouts.
        # S % 8 == 0 on this path, so both reshapes are pure tile re-indexing.
        x2 = x.reshape(TB * S, H)
        s_col = jnp.dot(x2, w_ref[...], preferred_element_type=jnp.float32)
        scores3 = s_col.reshape(TB, S, 1)                          # (TB, S, 1)
    else:
        # VPU multiply + lane reduce; products in x.dtype, accumulation in f32.
        w_row = w_ref[...]                                         # (1, H)
        prod = (x * w_row[None, :, :]).astype(jnp.float32)         # (TB, S, H)
        scores3 = jnp.sum(prod, axis=-1, keepdims=True)            # (TB, S, 1)

    # Relayout only the O(TB*S) scores into lane-dense form (S on lanes).
    scores = jnp.swapaxes(scores3, 1, 2) + b                       # (TB, 1, S) f32

    # ---- softmax over the sequence (lane) axis, max-stabilised, f32 ----------
    m = jnp.max(scores, axis=-1, keepdims=True)                    # (TB, 1, 1)
    p = jnp.exp(scores - m)                                        # (TB, 1, S)
    denom = jnp.sum(p, axis=-1, keepdims=True)                     # (TB, 1, 1)
    inv = pl.reciprocal(denom, approx=True)                        # EUP slot (free)
    inv = inv * (2.0 - denom * inv)                                # Newton step -> ~f32 exact
    wts = p * inv                                                  # (TB, 1, S)

    # ---- weighted sum on the MXU: (TB,1,S) @ (TB,S,H) -> (TB,1,H) ------------
    # K = S is on the lanes of the LHS and on the sublanes of the RHS (x stays
    # in its natural layout).  Matmul runs in x.dtype (matches the PyTorch op).
    out = jnp.einsum("bns,bsh->bnh", wts.astype(x.dtype), x,
                     preferred_element_type=jnp.float32)           # (TB, 1, H)

    out_ref[...] = out[:, 0, :].astype(out_ref.dtype)
    wts_ref[...] = wts[:, 0, :].astype(wts_ref.dtype)


def _round_up(n, m):
    return ((n + m - 1) // m) * m


_DEFAULT_PHYS_VMEM = 64 * 1024 * 1024  # v7x per-core (smallest current generation)


def _vmem_limit_bytes():
    """Scoped-VMEM limit with headroom: ~3/4 of physical, capped at 64 MiB.
    v5e/v6e (128 MiB physical) -> 64 MiB; v7x (64 MiB physical) -> 48 MiB."""
    phys = _DEFAULT_PHYS_VMEM
    try:
        phys = int(pltpu.get_tpu_info().vmem_capacity_bytes)
        if phys <= 0:
            phys = _DEFAULT_PHYS_VMEM
    except Exception:
        phys = _DEFAULT_PHYS_VMEM
    return min(64 * 1024 * 1024, (phys * 3) // 4)


def _choose_block_b(B, S, H, itemsize, vmem_limit_bytes, extra_row_bytes):
    """Sublane-aligned (multiple of 8) batch tile sized from the VMEM budget,
    preferring >= 2 grid steps so both v7x TensorCores get work."""
    per_row = 2 * (S * H + S + H) * itemsize      # double-buffered x / out / wts blocks
    per_row += 4 * (4 * S + 2 * H)                # f32 score / weight intermediates
    per_row += extra_row_bytes                    # path-specific temporaries
    budget = (vmem_limit_bytes * 7) // 10         # headroom for w, compiler scratch
    cap = max(8, (budget // max(per_row, 1)) // 8 * 8)
    b8 = _round_up(B, 8)
    if b8 <= cap:
        # Whole (8-padded) batch fits in one step; split in two for megacore
        # only when that introduces no extra padding.
        half = _round_up(b8 // 2, 8)
        if B > 8 and 2 * half == b8:
            return half
        return b8
    return min(cap, b8)


def attention_forward(x, w, b, *, block_b=None):
    """x: (B, S, H); w: (1, H) or (H,); b: (1,) or scalar.
    Returns (attn_output (B, H), attn_weights (B, S))."""
    B, S, H = x.shape
    flat_scores = (S % 8 == 0)

    if flat_scores:
        w_host = jnp.asarray(w).reshape(H, 1).astype(x.dtype)      # (H, 1) K-on-sublanes
        w_spec = pl.BlockSpec((H, 1), lambda i: (0, 0))
        extra_row_bytes = 0
    else:
        w_host = jnp.asarray(w).reshape(1, H).astype(x.dtype)      # (1, H) lane-dense row
        w_spec = pl.BlockSpec((1, H), lambda i: (0, 0))
        extra_row_bytes = S * H * 4                                 # f32 product temp

    b2d = jnp.asarray(b).reshape(1, 1).astype(jnp.float32)

    vmem_limit = _vmem_limit_bytes()
    TB = block_b if block_b is not None else _choose_block_b(
        B, S, H, x.dtype.itemsize, vmem_limit, extra_row_bytes)
    TB = max(8, _round_up(TB, 8))

    # Pad the batch to a sublane multiple (zero rows give a benign uniform
    # softmax and are sliced away afterwards).  TB never exceeds the padded B.
    B_pad = _round_up(B, 8)
    TB = min(TB, B_pad)
    x_in = x if B_pad == B else jnp.pad(x, ((0, B_pad - B), (0, 0), (0, 0)))
    grid = (pl.cdiv(B_pad, TB),)

    kernel = functools.partial(_attention_kernel, flat_scores=flat_scores)

    out, wts = pl.pallas_call(
        kernel,
        out_shape=(
            jax.ShapeDtypeStruct((B_pad, H), x.dtype),
            jax.ShapeDtypeStruct((B_pad, S), x.dtype),
        ),
        grid=grid,
        in_specs=[
            pl.BlockSpec((TB, S, H), lambda i: (i, 0, 0)),          # x batch tile
            w_spec,                                                  # shared weight (VMEM)
            pl.BlockSpec(memory_space=pltpu.MemorySpace.SMEM),       # bias scalar (SMEM)
        ],
        out_specs=[
            pl.BlockSpec((TB, H), lambda i: (i, 0)),                 # lane-dense stores
            pl.BlockSpec((TB, S), lambda i: (i, 0)),
        ],
        compiler_params=pltpu.CompilerParams(
            dimension_semantics=("parallel",),
            vmem_limit_bytes=int(vmem_limit),
        ),
    )(x_in, w_host, b2d)

    if B_pad != B:
        out, wts = out[:B], wts[:B]
    return out, wts


def _reference(x, w, b):
    scores = jnp.einsum("bsh,h->bs", x, jnp.asarray(w).reshape(-1)) + jnp.asarray(b).reshape(())
    wts = jax.nn.softmax(scores, axis=1)
    out = jnp.sum(x * wts[..., None], axis=1)
    return out, wts


if __name__ == "__main__":
    B, S, H = 4, 8, 32
    key = jax.random.PRNGKey(0)
    kx, kw, kb = jax.random.split(key, 3)

    x = jax.random.normal(kx, (B, S, H), dtype=jnp.float32)
    # Deterministic parameters for nn.Linear(hidden_dim, 1): weight (1, H), bias (1,)
    w = jax.random.normal(kw, (1, H), dtype=jnp.float32) * 0.1
    b = jax.random.normal(kb, (1,), dtype=jnp.float32) * 0.1

    attn_out, attn_wts = attention_forward(x, w, b)
    jax.block_until_ready((attn_out, attn_wts))

    ref_out, ref_wts = _reference(x, w, b)
    assert jnp.allclose(attn_out, ref_out, atol=1e-5, rtol=1e-5)
    assert jnp.allclose(attn_wts, ref_wts, atol=1e-5, rtol=1e-5)

    print("KERNEL_OK")
</pallas_src>

<mosaic_0001>
module attributes {stable_mosaic.version = 11 : i64} {
  func.func @_attention_kernel(%arg0: i32, %arg1: memref<8x8x32xf32, #tpu.memory_space<vmem>>, %arg2: memref<32x1xf32, #tpu.memory_space<vmem>>, %arg3: memref<1x1xf32, #tpu.memory_space<smem>>, %arg4: memref<8x32xf32, #tpu.memory_space<vmem>>, %arg5: memref<8x8xf32, #tpu.memory_space<vmem>>) attributes {dimension_semantics = [#tpu.dimension_semantics<parallel>], iteration_bounds = array<i64: 1>, scalar_prefetch = 0 : i64, scratch_operands = 0 : i64, tpu.core_type = #tpu.core_type<tc>, window_params = [{transform_indices = @transform_0, window_bounds = array<i64: 8, 8, 32>}, {pipeline_mode = #tpu.pipeline_mode<synchronous>, transform_indices = @transform_1, window_bounds = array<i64: 32, 1>}, {transform_indices = @transform_2, window_bounds = array<i64: 1, 1>}, {transform_indices = @transform_3, window_bounds = array<i64: 8, 32>}, {transform_indices = @transform_4, window_bounds = array<i64: 8, 8>}]} {
    %c0 = arith.constant 0 : index
    %c0_0 = arith.constant 0 : index
    %c0_1 = arith.constant 0 : index
    %0 = vector.load %arg1[%c0, %c0_0, %c0_1] : memref<8x8x32xf32, #tpu.memory_space<vmem>>, vector<8x8x32xf32>
    %c0_2 = arith.constant 0 : index
    %c0_3 = arith.constant 0 : index
    %1 = memref.load %arg3[%c0_2, %c0_3] : memref<1x1xf32, #tpu.memory_space<smem>>
    %2 = vector.shape_cast %0 : vector<8x8x32xf32> to vector<64x32xf32>
    %c0_4 = arith.constant 0 : index
    %c0_5 = arith.constant 0 : index
    %3 = vector.load %arg2[%c0_4, %c0_5] : memref<32x1xf32, #tpu.memory_space<vmem>>, vector<32x1xf32>
    %cst = arith.constant dense<0.000000e+00> : vector<64x1xf32>
    %4 = tpu.matmul %2, %3, %cst {dimension_numbers = #tpu.dot_dimension_numbers<[1], [0], [0], [1], [0, 0, 1, 1], [], []>} : vector<64x32xf32>, vector<32x1xf32>, vector<64x1xf32> -> vector<64x1xf32>
    %5 = vector.shape_cast %4 : vector<64x1xf32> to vector<8x8x1xf32>
    %6 = tpu.transpose %5, [0, 2, 1] : vector<8x8x1xf32> -> vector<8x1x8xf32>
    %7 = vector.broadcast %1 : f32 to vector<8x1x8xf32>
    %8 = arith.addf %6, %7 : vector<8x1x8xf32>
    %cst_6 = arith.constant dense<0xFF800000> : vector<8x1xf32>
    %9 = vector.multi_reduction <maximumf>, %8, %cst_6 [2] : vector<8x1x8xf32> to vector<8x1xf32>
    %10 = vector.shape_cast %9 : vector<8x1xf32> to vector<8x1x1xf32>
    %11 = vector.broadcast %10 : vector<8x1x1xf32> to vector<8x1x8xf32>
    %12 = arith.subf %8, %11 : vector<8x1x8xf32>
    %13 = math.exp %12 : vector<8x1x8xf32>
    %cst_7 = arith.constant dense<0.000000e+00> : vector<8x1xf32>
    %14 = vector.multi_reduction <add>, %13, %cst_7 [2] : vector<8x1x8xf32> to vector<8x1xf32>
    %15 = vector.shape_cast %14 : vector<8x1xf32> to vector<8x1x1xf32>
    %16 = tpu.reciprocal %15 {approx = true} : vector<8x1x1xf32> -> vector<8x1x1xf32>
    %17 = arith.mulf %15, %16 : vector<8x1x1xf32>
    %cst_8 = arith.constant 2.000000e+00 : f32
    %18 = vector.broadcast %cst_8 : f32 to vector<8x1x1xf32>
    %19 = arith.subf %18, %17 : vector<8x1x1xf32>
    %20 = arith.mulf %16, %19 : vector<8x1x1xf32>
    %21 = vector.broadcast %20 : vector<8x1x1xf32> to vector<8x1x8xf32>
    %22 = arith.mulf %13, %21 : vector<8x1x8xf32>
    "tpu.trace_start"() <{level = 10 : i32, message = "bns,bsh->bnh"}> : () -> ()
    %cst_9 = arith.constant dense<0.000000e+00> : vector<8x1x32xf32>
    %23 = tpu.matmul %22, %0, %cst_9 {dimension_numbers = #tpu.dot_dimension_numbers<[2], [1], [1], [2], [0, 0, 0, 1, 1, 2], [0], [0]>} : vector<8x1x8xf32>, vector<8x8x32xf32>, vector<8x1x32xf32> -> vector<8x1x32xf32>
    "tpu.trace_stop"() : () -> ()
    %24 = vector.shape_cast %23 : vector<8x1x32xf32> to vector<8x32xf32>
    %c0_10 = arith.constant 0 : index
    %c0_11 = arith.constant 0 : index
    %25 = vector.load %arg4[%c0_10, %c0_11] : memref<8x32xf32, #tpu.memory_space<vmem>>, vector<8x32xf32>
    tpu.vector_store %arg4[%c0_10, %c0_11], %24 {strides = array<i32>} : memref<8x32xf32, #tpu.memory_space<vmem>>, vector<8x32xf32>,
    %26 = vector.shape_cast %22 : vector<8x1x8xf32> to vector<8x8xf32>
    %c0_12 = arith.constant 0 : index
    %c0_13 = arith.constant 0 : index
    %27 = vector.load %arg5[%c0_12, %c0_13] : memref<8x8xf32, #tpu.memory_space<vmem>>, vector<8x8xf32>
    tpu.vector_store %arg5[%c0_12, %c0_13], %26 {strides = array<i32>} : memref<8x8xf32, #tpu.memory_space<vmem>>, vector<8x8xf32>,
    return
  }
  func.func @transform_0(%arg0: i32) -> (i32, i32, i32) {
    %c0_i32 = arith.constant 0 : i32
    %c0_i32_0 = arith.constant 0 : i32
    %c0_i32_1 = arith.constant 0 : i32
    return %arg0, %c0_i32, %c0_i32_0 : i32, i32, i32
  }
  func.func @transform_1(%arg0: i32) -> (i32, i32) {
    %c0_i32 = arith.constant 0 : i32
    %c0_i32_0 = arith.constant 0 : i32
    %c0_i32_1 = arith.constant 0 : i32
    return %c0_i32, %c0_i32_0 : i32, i32
  }
  func.func @transform_2(%arg0: i32) -> (i32, i32) {
    %c0_i32 = arith.constant 0 : i32
    %c0_i32_0 = arith.constant 0 : i32
    %c0_i32_1 = arith.constant 0 : i32
    return %c0_i32, %c0_i32_0 : i32, i32
  }
  func.func @transform_3(%arg0: i32) -> (i32, i32) {
    %c0_i32 = arith.constant 0 : i32
    %c0_i32_0 = arith.constant 0 : i32
    return %arg0, %c0_i32 : i32, i32
  }
  func.func @transform_4(%arg0: i32) -> (i32, i32) {
    %c0_i32 = arith.constant 0 : i32
    %c0_i32_0 = arith.constant 0 : i32
    return %arg0, %c0_i32 : i32, i32
  }
}

</mosaic_0001>

<llo_original>
// kernel: tpu_custom_call.1
$region0: #{tpu_custom_call.1}
  #allocation0 [shape = 'u32[]', space=smem, size = 0x4, offset = 0x4, fixed_abs, tag = 'smem constant byte address 0x4 - core index']
  #allocation1 [shape = 'u32[144,128]{1,0:T(1,128)}', space=vmem, size = 0x12000, scoped, tag = 'internal scratch']
  #allocation2 [shape = 'f32[1,1]{1,0:T(1,128)S(6)}', space=smem, size = 0x200, scoped, tag = 'scoped memory for tpu_custom_call.1']
  %s0 = inlined_call_operand.hbm [shape: f32[8,8,32], index: 0, kind: input, shape index: {}]
  %s1 = inlined_call_operand.vmem [shape: f32[32,1], index: 1, kind: input, shape index: {}]
  %s2 = inlined_call_operand.<no memory space> [shape: f32[1,1], index: 2, kind: input, shape index: {}]
  %s3 = inlined_call_operand.hbm [shape: f32[8,32], index: 3, kind: output, shape index: {0}]
  %s4 = inlined_call_operand.hbm [shape: f32[8,8], index: 4, kind: output, shape index: {1}]
  %5 = xla_tuple %s3, %s4
  %s6 = sld [smem:[#allocation0]]
  $region34: #{tpu_custom_call.1} parent=0
    _
  %s8 = ssub.s32 1, %s6
  %s9 = scalar_select 0, %s8, %s6
  %10 = sst [smem:[#allocation2]] %s2
  $region1: #{tpu_custom_call.1} parent=0
    #allocation3 [shape = 'u8[32768]{0}', space=vmem, size = 0x8000, scoped, tag = 'input window, operand 0, single buffered']
    #allocation4 [shape = 's32[1]{0}', space=sflag, size = 0x4, scoped, tag = 'scoped memory for tpu_custom_call.1']
    #allocation5 [shape = 's32[1]{0}', space=sflag, size = 0x4, scoped, tag = 'scoped memory for tpu_custom_call.1']
    #allocation6 [shape = 'u8[4096]{0}', space=vmem, size = 0x1000, scoped, tag = 'output window, operand 0, single buffered']
    #allocation7 [shape = 'u8[4096]{0}', space=vmem, size = 0x1000, scoped, tag = 'output window, operand 1, single buffered']
    #allocation8 [shape = 's32[1]{0}', space=sflag, size = 0x4, scoped, tag = 'scoped memory for tpu_custom_call.1']
    %11 = vsyncpa [#allocation4], 0
    %12 = vsyncpa [#allocation5], 0
    %13 = vsyncpa [#allocation8], 0
    // Predicated region
    $region2: #{tpu_custom_call.1} parent=1 // pred_check
      _
    $region3: #{tpu_custom_call.1} parent=1 // pred_check_branch
      %15 = sbr.rel (0) target = $region5
    $region4: #{tpu_custom_call.1} parent=1 // pred_region
      %s17 = ssub.s32 1024, 1024
      %18 = vsyncadd [#allocation4], %s17
      %s19 = sshll.u32 [#allocation3], 4
      %s20 = int_to_ptr.vmem [resolvable:$true] %s19
      %25 = dma.hbm_to_vmem [thread:$0]  %s0, 1024, %s20, [#allocation4], 128, 128, 8
    $region5: #{tpu_custom_call.1} parent=1 // pred_fallthru
      _
    // Predicated region
    $region6: #{tpu_custom_call.1} parent=1 // pred_check
      _
    $region7: #{tpu_custom_call.1} parent=1 // pred_check_branch
      %27 = sbr.rel (0) target = $region9
    $region8: #{tpu_custom_call.1} parent=1 // pred_region
      _
    $region9: #{tpu_custom_call.1} parent=1 // pred_fallthru
      _
    // Predicated region
    $region10: #{tpu_custom_call.1} parent=1 // pred_check
      _
    $region11: #{tpu_custom_call.1} parent=1 // pred_check_branch
      %29 = sbr.rel (0) target = $region13
    $region12: #{tpu_custom_call.1} parent=1 // pred_region
      _
    $region13: #{tpu_custom_call.1} parent=1 // pred_fallthru
      _
    // Predicated region
    $region14: #{tpu_custom_call.1} parent=1 // pred_check
      _
    $region15: #{tpu_custom_call.1} parent=1 // pred_check_branch
      %31 = sbr.rel (0) target = $region17
    $region16: #{tpu_custom_call.1} parent=1 // pred_region
      %32 = dma.done [#allocation4], 1024
    $region17: #{tpu_custom_call.1} parent=1 // pred_fallthru
      _
    %v33 = vld [vmem:[#allocation3] sm:$0xff]
    %v34 = vld [vmem:[#allocation3 + $0x8] sm:$0xff]
    %v35 = vld [vmem:[#allocation3 + $0x10] sm:$0xff]
    %v36 = vld [vmem:[#allocation3 + $0x18] sm:$0xff]
    %v37 = vld [vmem:[#allocation3 + $0x20] sm:$0xff]
    %v38 = vld [vmem:[#allocation3 + $0x28] sm:$0xff]
    %v39 = vld [vmem:[#allocation3 + $0x30] sm:$0xff]
    %v40 = vld [vmem:[#allocation3 + $0x38] sm:$0xff]
    %s41 = sld [smem:[#allocation2]]
    %v42 = vld [vmem:[%s1] sm:$0xff]
    %v43 = vld [vmem:[%s1 + $0x8] sm:$0xff]
    %v44 = vld [vmem:[%s1 + $0x10] sm:$0xff]
    %v45 = vld [vmem:[%s1 + $0x18] sm:$0xff]
    %vm46 = vcmask 261120
    %v48 = vsel %vm46, %v33, 0
    %v51 = vsel %vm46, %v34, 0
    %v54 = vsel %vm46, %v35, 0
    %v57 = vsel %vm46, %v36, 0
    %v60 = vsel %vm46, %v37, 0
    %v63 = vsel %vm46, %v38, 0
    %v66 = vsel %vm46, %v39, 0
    %v69 = vsel %vm46, %v40, 0
    %71 = vmatprep.subr.mxu0 0.0
    %72 = vmatpush1.msra.mxu0 %v42
    %73 = vmatprep.subr.mxu0 0.0
    %74 = vmatpush1.msra.mxu0 %v43
    %75 = vmatprep.subr.mxu0 0.0
    %76 = vmatpush1.msra.mxu0 %v44
    %77 = vmatprep.subr.mxu0 0.0
    %78 = vmatpush1.msra.mxu0 %v45
    %79 = vmatprep.subr.mxu0 0.0
    %80 = vmatpush1.msra.mxu0 0.0
    %81 = vmatprep.subr.mxu0 0.0
    %82 = vmatpush1.msra.mxu0 0.0
    %83 = vmatprep.subr.mxu0 0.0
    %84 = vmatpush1.msra.mxu0 0.0
    %85 = vmatprep.subr.mxu0 0.0
    %86 = vmatpush1.msra.mxu0 0.0
    %87 = vmatprep.subr.mxu0 0.0
    %88 = vmatpush1.msra.mxu0 0.0
    %89 = vmatprep.subr.mxu0 0.0
    %90 = vmatpush1.msra.mxu0 0.0
    %91 = vmatprep.subr.mxu0 0.0
    %92 = vmatpush1.msra.mxu0 0.0
    %93 = vmatprep.subr.mxu0 0.0
    %94 = vmatpush1.msra.mxu0 0.0
    %95 = vmatprep.subr.mxu0 0.0
    %96 = vmatpush1.msra.mxu0 0.0
    %97 = vmatprep.subr.mxu0 0.0
    %98 = vmatpush1.msra.mxu0 0.0
    %99 = vmatprep.subr.mxu0 0.0
    %100 = vmatpush1.msra.mxu0 0.0
    %101 = vmatprep.subr.mxu0 0.0
    %102 = vmatpush1.msra.mxu0 0.0
    %103 = vmatprep.subr.mxu0 0.0
    %104 = vmatpush1.msra.mxu0 0.0
    %105 = vmatprep.subr.mxu0 0.0
    %106 = vmatpush1.msra.mxu0 0.0
    %107 = vmatprep.subr.mxu0 0.0
    %108 = vmatpush1.msra.mxu0 0.0
    %109 = vmatprep.subr.mxu0 0.0
    %110 = vmatpush1.msra.mxu0 0.0
    %111 = vmatprep.subr.mxu0 0.0
    %112 = vmatpush1.msra.mxu0 0.0
    %113 = vmatprep.subr.mxu0 0.0
    %114 = vmatpush1.msra.mxu0 0.0
    %115 = vmatprep.subr.mxu0 0.0
    %116 = vmatpush1.msra.mxu0 0.0
    %117 = vmatprep.subr.mxu0 0.0
    %118 = vmatpush1.msra.mxu0 0.0
    %119 = vmatprep.subr.mxu0 0.0
    %120 = vmatpush1.msra.mxu0 0.0
    %121 = vmatprep.subr.mxu0 0.0
    %122 = vmatpush1.msra.mxu0 0.0
    %123 = vmatprep.subr.mxu0 0.0
    %124 = vmatpush1.msra.mxu0 0.0
    %125 = vmatprep.subr.mxu0 0.0
    %126 = vmatpush1.msra.mxu0 0.0
    %127 = vmatprep.subr.mxu0 0.0
    %128 = vmatpush1.msra.mxu0 0.0
    %129 = vmatprep.subr.mxu0 0.0
    %130 = vmatpush1.msra.mxu0 0.0
    %131 = vmatprep.subr.mxu0 0.0
    %132 = vmatpush1.msra.mxu0 0.0
    %133 = vmatprep.subr.mxu0 0.0
    %134 = vmatpush1.msra.mxu0 0.0
    %135 = vmatprep.mubr.f32.mxu0 0.0
    %136 = vmatmul.mubr.f32.gmra.mrb[0].mxu0 %v48
    %v137 = vpop.f32.mrb[0].mxu0
    %v138 = vadd.f32 0.0, %v137
    %v139 = vpop.f32.mrb[0].mxu0
    %140 = vmatprep.mubr.f32.mxu0 0.0
    %141 = vmatmul.mubr.f32.gmra.mrb[0].mxu0 %v51
    %v142 = vpop.f32.mrb[0].mxu0
    %v143 = vadd.f32 0.0, %v142
    %v144 = vpop.f32.mrb[0].mxu0
    %145 = vmatprep.mubr.f32.mxu0 0.0
    %146 = vmatmul.mubr.f32.gmra.mrb[0].mxu0 %v54
    %v147 = vpop.f32.mrb[0].mxu0
    %v148 = vadd.f32 0.0, %v147
    %v149 = vpop.f32.mrb[0].mxu0
    %150 = vmatprep.mubr.f32.mxu0 0.0
    %151 = vmatmul.mubr.f32.gmra.mrb[0].mxu0 %v57
    %v152 = vpop.f32.mrb[0].mxu0
    %v153 = vadd.f32 0.0, %v152
    %v154 = vpop.f32.mrb[0].mxu0
    %155 = vmatprep.mubr.f32.mxu0 0.0
    %156 = vmatmul.mubr.f32.gmra.mrb[0].mxu0 %v60
    %v157 = vpop.f32.mrb[0].mxu0
    %v158 = vadd.f32 0.0, %v157
    %v159 = vpop.f32.mrb[0].mxu0
    %160 = vmatprep.mubr.f32.mxu0 0.0
    %161 = vmatmul.mubr.f32.gmra.mrb[0].mxu0 %v63
    %v162 = vpop.f32.mrb[0].mxu0
    %v163 = vadd.f32 0.0, %v162
    %v164 = vpop.f32.mrb[0].mxu0
    %165 = vmatprep.mubr.f32.mxu0 0.0
    %166 = vmatmul.mubr.f32.gmra.mrb[0].mxu0 %v66
    %v167 = vpop.f32.mrb[0].mxu0
    %v168 = vadd.f32 0.0, %v167
    %v169 = vpop.f32.mrb[0].mxu0
    %170 = vmatprep.mubr.f32.mxu0 0.0
    %171 = vmatmul.mubr.f32.gmra.mrb[0].mxu0 %v69
    %v172 = vpop.f32.mrb[0].mxu0
    %v173 = vadd.f32 0.0, %v172
    %v174 = vpop.f32.mrb[0].mxu0
    %175 = vdwg.mxu0
    %176 = vxpose.xlu0.b32.start [1/16] %v138, 128
    %177 = vxpose.xlu0.b32.cont [2/16] 0.0, 128
    %178 = vxpose.xlu0.b32.cont [3/16] 0.0, 128
    %179 = vxpose.xlu0.b32.cont [4/16] 0.0, 128
    %180 = vxpose.xlu0.b32.cont [5/16] 0.0, 128
    %181 = vxpose.xlu0.b32.cont [6/16] 0.0, 128
    %182 = vxpose.xlu0.b32.cont [7/16] 0.0, 128
    %183 = vxpose.xlu0.b32.cont [8/16] 0.0, 128
    %184 = vxpose.xlu0.b32.cont [9/16] 0.0, 128
    %185 = vxpose.xlu0.b32.cont [10/16] 0.0, 128
    %186 = vxpose.xlu0.b32.cont [11/16] 0.0, 128
    %187 = vxpose.xlu0.b32.cont [12/16] 0.0, 128
    %188 = vxpose.xlu0.b32.cont [13/16] 0.0, 128
    %189 = vxpose.xlu0.b32.cont [14/16] 0.0, 128
    %190 = vxpose.xlu0.b32.cont [15/16] 0.0, 128
    %191 = vxpose.xlu0.b32.end [16/16] 0.0, 128
    %v192 = vpop.trf.xlu0
    %v193 = vpop.trf.xlu0
    %v194 = vpop.trf.xlu0
    %v195 = vpop.trf.xlu0
    %v196 = vpop.trf.xlu0
    %v197 = vpop.trf.xlu0
    %v198 = vpop.trf.xlu0
    %v199 = vpop.trf.xlu0
    %v200 = vpop.trf.xlu0
    %v201 = vpop.trf.xlu0
    %v202 = vpop.trf.xlu0
    %v203 = vpop.trf.xlu0
    %v204 = vpop.trf.xlu0
    %v205 = vpop.trf.xlu0
    %v206 = vpop.trf.xlu0
    %v207 = vpop.trf.xlu0
    %208 = vxpose.xlu0.b32.start [1/16] %v143, 128
    %209 = vxpose.xlu0.b32.cont [2/16] 0.0, 128
    %210 = vxpose.xlu0.b32.cont [3/16] 0.0, 128
    %211 = vxpose.xlu0.b32.cont [4/16] 0.0, 128
    %212 = vxpose.xlu0.b32.cont [5/16] 0.0, 128
    %213 = vxpose.xlu0.b32.cont [6/16] 0.0, 128
    %214 = vxpose.xlu0.b32.cont [7/16] 0.0, 128
    %215 = vxpose.xlu0.b32.cont [8/16] 0.0, 128
    %216 = vxpose.xlu0.b32.cont [9/16] 0.0, 128
    %217 = vxpose.xlu0.b32.cont [10/16] 0.0, 128
    %218 = vxpose.xlu0.b32.cont [11/16] 0.0, 128
    %219 = vxpose.xlu0.b32.cont [12/16] 0.0, 128
    %220 = vxpose.xlu0.b32.cont [13/16] 0.0, 128
    %221 = vxpose.xlu0.b32.cont [14/16] 0.0, 128
    %222 = vxpose.xlu0.b32.cont [15/16] 0.0, 128
    %223 = vxpose.xlu0.b32.end [16/16] 0.0, 128
    %v224 = vpop.trf.xlu0
    %v225 = vpop.trf.xlu0
    %v226 = vpop.trf.xlu0
    %v227 = vpop.trf.xlu0
    %v228 = vpop.trf.xlu0
    %v229 = vpop.trf.xlu0
    %v230 = vpop.trf.xlu0
    %v231 = vpop.trf.xlu0
    %v232 = vpop.trf.xlu0
    %v233 = vpop.trf.xlu0
    %v234 = vpop.trf.xlu0
    %v235 = vpop.trf.xlu0
    %v236 = vpop.trf.xlu0
    %v237 = vpop.trf.xlu0
    %v238 = vpop.trf.xlu0
    %v239 = vpop.trf.xlu0
    %240 = vxpose.xlu0.b32.start [1/16] %v148, 128
    %241 = vxpose.xlu0.b32.cont [2/16] 0.0, 128
    %242 = vxpose.xlu0.b32.cont [3/16] 0.0, 128
    %243 = vxpose.xlu0.b32.cont [4/16] 0.0, 128
    %244 = vxpose.xlu0.b32.cont [5/16] 0.0, 128
    %245 = vxpose.xlu0.b32.cont [6/16] 0.0, 128
    %246 = vxpose.xlu0.b32.cont [7/16] 0.0, 128
    %247 = vxpose.xlu0.b32.cont [8/16] 0.0, 128
    %248 = vxpose.xlu0.b32.cont [9/16] 0.0, 128
    %249 = vxpose.xlu0.b32.cont [10/16] 0.0, 128
    %250 = vxpose.xlu0.b32.cont [11/16] 0.0, 128
    %251 = vxpose.xlu0.b32.cont [12/16] 0.0, 128
    %252 = vxpose.xlu0.b32.cont [13/16] 0.0, 128
    %253 = vxpose.xlu0.b32.cont [14/16] 0.0, 128
    %254 = vxpose.xlu0.b32.cont [15/16] 0.0, 128
    %255 = vxpose.xlu0.b32.end [16/16] 0.0, 128
    %v256 = vpop.trf.xlu0
    %v257 = vpop.trf.xlu0
    %v258 = vpop.trf.xlu0
    %v259 = vpop.trf.xlu0
    %v260 = vpop.trf.xlu0
    %v261 = vpop.trf.xlu0
    %v262 = vpop.trf.xlu0
    %v263 = vpop.trf.xlu0
    %v264 = vpop.trf.xlu0
    %v265 = vpop.trf.xlu0
    %v266 = vpop.trf.xlu0
    %v267 = vpop.trf.xlu0
    %v268 = vpop.trf.xlu0
    %v269 = vpop.trf.xlu0
    %v270 = vpop.trf.xlu0
    %v271 = vpop.trf.xlu0
    %272 = vxpose.xlu0.b32.start [1/16] %v153, 128
    %273 = vxpose.xlu0.b32.cont [2/16] 0.0, 128
    %274 = vxpose.xlu0.b32.cont [3/16] 0.0, 128
    %275 = vxpose.xlu0.b32.cont [4/16] 0.0, 128
    %276 = vxpose.xlu0.b32.cont [5/16] 0.0, 128
    %277 = vxpose.xlu0.b32.cont [6/16] 0.0, 128
    %278 = vxpose.xlu0.b32.cont [7/16] 0.0, 128
    %279 = vxpose.xlu0.b32.cont [8/16] 0.0, 128
    %280 = vxpose.xlu0.b32.cont [9/16] 0.0, 128
    %281 = vxpose.xlu0.b32.cont [10/16] 0.0, 128
    %282 = vxpose.xlu0.b32.cont [11/16] 0.0, 128
    %283 = vxpose.xlu0.b32.cont [12/16] 0.0, 128
    %284 = vxpose.xlu0.b32.cont [13/16] 0.0, 128
    %285 = vxpose.xlu0.b32.cont [14/16] 0.0, 128
    %286 = vxpose.xlu0.b32.cont [15/16] 0.0, 128
    %287 = vxpose.xlu0.b32.end [16/16] 0.0, 128
    %v288 = vpop.trf.xlu0
    %v289 = vpop.trf.xlu0
    %v290 = vpop.trf.xlu0
    %v291 = vpop.trf.xlu0
    %v292 = vpop.trf.xlu0
    %v293 = vpop.trf.xlu0
    %v294 = vpop.trf.xlu0
    %v295 = vpop.trf.xlu0
    %v296 = vpop.trf.xlu0
    %v297 = vpop.trf.xlu0
    %v298 = vpop.trf.xlu0
    %v299 = vpop.trf.xlu0
    %v300 = vpop.trf.xlu0
    %v301 = vpop.trf.xlu0
    %v302 = vpop.trf.xlu0
    %v303 = vpop.trf.xlu0
    %304 = vxpose.xlu0.b32.start [1/16] %v158, 128
    %305 = vxpose.xlu0.b32.cont [2/16] 0.0, 128
    %306 = vxpose.xlu0.b32.cont [3/16] 0.0, 128
    %307 = vxpose.xlu0.b32.cont [4/16] 0.0, 128
    %308 = vxpose.xlu0.b32.cont [5/16] 0.0, 128
    %309 = vxpose.xlu0.b32.cont [6/16] 0.0, 128
    %310 = vxpose.xlu0.b32.cont [7/16] 0.0, 128
    %311 = vxpose.xlu0.b32.cont [8/16] 0.0, 128
    %312 = vxpose.xlu0.b32.cont [9/16] 0.0, 128
    %313 = vxpose.xlu0.b32.cont [10/16] 0.0, 128
    %314 = vxpose.xlu0.b32.cont [11/16] 0.0, 128
    %315 = vxpose.xlu0.b32.cont [12/16] 0.0, 128
    %316 = vxpose.xlu0.b32.cont [13/16] 0.0, 128
    %317 = vxpose.xlu0.b32.cont [14/16] 0.0, 128
    %318 = vxpose.xlu0.b32.cont [15/16] 0.0, 128
    %319 = vxpose.xlu0.b32.end [16/16] 0.0, 128
    %v320 = vpop.trf.xlu0
    %v321 = vpop.trf.xlu0
    %v322 = vpop.trf.xlu0
    %v323 = vpop.trf.xlu0
    %v324 = vpop.trf.xlu0
    %v325 = vpop.trf.xlu0
    %v326 = vpop.trf.xlu0
    %v327 = vpop.trf.xlu0
    %v328 = vpop.trf.xlu0
    %v329 = vpop.trf.xlu0
    %v330 = vpop.trf.xlu0
    %v331 = vpop.trf.xlu0
    %v332 = vpop.trf.xlu0
    %v333 = vpop.trf.xlu0
    %v334 = vpop.trf.xlu0
    %v335 = vpop.trf.xlu0
    %336 = vxpose.xlu0.b32.start [1/16] %v163, 128
    %337 = vxpose.xlu0.b32.cont [2/16] 0.0, 128
    %338 = vxpose.xlu0.b32.cont [3/16] 0.0, 128
    %339 = vxpose.xlu0.b32.cont [4/16] 0.0, 128
    %340 = vxpose.xlu0.b32.cont [5/16] 0.0, 128
    %341 = vxpose.xlu0.b32.cont [6/16] 0.0, 128
    %342 = vxpose.xlu0.b32.cont [7/16] 0.0, 128
    %343 = vxpose.xlu0.b32.cont [8/16] 0.0, 128
    %344 = vxpose.xlu0.b32.cont [9/16] 0.0, 128
    %345 = vxpose.xlu0.b32.cont [10/16] 0.0, 128
    %346 = vxpose.xlu0.b32.cont [11/16] 0.0, 128
    %347 = vxpose.xlu0.b32.cont [12/16] 0.0, 128
    %348 = vxpose.xlu0.b32.cont [13/16] 0.0, 128
    %349 = vxpose.xlu0.b32.cont [14/16] 0.0, 128
    %350 = vxpose.xlu0.b32.cont [15/16] 0.0, 128
    %351 = vxpose.xlu0.b32.end [16/16] 0.0, 128
    %v352 = vpop.trf.xlu0
    %v353 = vpop.trf.xlu0
    %v354 = vpop.trf.xlu0
    %v355 = vpop.trf.xlu0
    %v356 = vpop.trf.xlu0
    %v357 = vpop.trf.xlu0
    %v358 = vpop.trf.xlu0
    %v359 = vpop.trf.xlu0
    %v360 = vpop.trf.xlu0
    %v361 = vpop.trf.xlu0
    %v362 = vpop.trf.xlu0
    %v363 = vpop.trf.xlu0
    %v364 = vpop.trf.xlu0
    %v365 = vpop.trf.xlu0
    %v366 = vpop.trf.xlu0
    %v367 = vpop.trf.xlu0
    %368 = vxpose.xlu0.b32.start [1/16] %v168, 128
    %369 = vxpose.xlu0.b32.cont [2/16] 0.0, 128
    %370 = vxpose.xlu0.b32.cont [3/16] 0.0, 128
    %371 = vxpose.xlu0.b32.cont [4/16] 0.0, 128
    %372 = vxpose.xlu0.b32.cont [5/16] 0.0, 128
    %373 = vxpose.xlu0.b32.cont [6/16] 0.0, 128
    %374 = vxpose.xlu0.b32.cont [7/16] 0.0, 128
    %375 = vxpose.xlu0.b32.cont [8/16] 0.0, 128
    %376 = vxpose.xlu0.b32.cont [9/16] 0.0, 128
    %377 = vxpose.xlu0.b32.cont [10/16] 0.0, 128
    %378 = vxpose.xlu0.b32.cont [11/16] 0.0, 128
    %379 = vxpose.xlu0.b32.cont [12/16] 0.0, 128
    %380 = vxpose.xlu0.b32.cont [13/16] 0.0, 128
    %381 = vxpose.xlu0.b32.cont [14/16] 0.0, 128
    %382 = vxpose.xlu0.b32.cont [15/16] 0.0, 128
    %383 = vxpose.xlu0.b32.end [16/16] 0.0, 128
    %v384 = vpop.trf.xlu0
    %v385 = vpop.trf.xlu0
    %v386 = vpop.trf.xlu0
    %v387 = vpop.trf.xlu0
    %v388 = vpop.trf.xlu0
    %v389 = vpop.trf.xlu0
    %v390 = vpop.trf.xlu0
    %v391 = vpop.trf.xlu0
    %v392 = vpop.trf.xlu0
    %v393 = vpop.trf.xlu0
    %v394 = vpop.trf.xlu0
    %v395 = vpop.trf.xlu0
    %v396 = vpop.trf.xlu0
    %v397 = vpop.trf.xlu0
    %v398 = vpop.trf.xlu0
    %v399 = vpop.trf.xlu0
    %400 = vxpose.xlu0.b32.start [1/16] %v173, 128
    %401 = vxpose.xlu0.b32.cont [2/16] 0.0, 128
    %402 = vxpose.xlu0.b32.cont [3/16] 0.0, 128
    %403 = vxpose.xlu0.b32.cont [4/16] 0.0, 128
    %404 = vxpose.xlu0.b32.cont [5/16] 0.0, 128
    %405 = vxpose.xlu0.b32.cont [6/16] 0.0, 128
    %406 = vxpose.xlu0.b32.cont [7/16] 0.0, 128
    %407 = vxpose.xlu0.b32.cont [8/16] 0.0, 128
    %408 = vxpose.xlu0.b32.cont [9/16] 0.0, 128
    %409 = vxpose.xlu0.b32.cont [10/16] 0.0, 128
    %410 = vxpose.xlu0.b32.cont [11/16] 0.0, 128
    %411 = vxpose.xlu0.b32.cont [12/16] 0.0, 128
    %412 = vxpose.xlu0.b32.cont [13/16] 0.0, 128
    %413 = vxpose.xlu0.b32.cont [14/16] 0.0, 128
    %414 = vxpose.xlu0.b32.cont [15/16] 0.0, 128
    %415 = vxpose.xlu0.b32.end [16/16] 0.0, 128
    %v416 = vpop.trf.xlu0
    %v417 = vpop.trf.xlu0
    %v418 = vpop.trf.xlu0
    %v419 = vpop.trf.xlu0
    %v420 = vpop.trf.xlu0
    %v421 = vpop.trf.xlu0
    %v422 = vpop.trf.xlu0
    %v423 = vpop.trf.xlu0
    %v424 = vpop.trf.xlu0
    %v425 = vpop.trf.xlu0
    %v426 = vpop.trf.xlu0
    %v427 = vpop.trf.xlu0
    %v428 = vpop.trf.xlu0
    %v429 = vpop.trf.xlu0
    %v430 = vpop.trf.xlu0
    %v431 = vpop.trf.xlu0
    %v432 = vstv %s41
    %v433 = vadd.f32 %v192, %v432
    %v434 = vadd.f32 %v224, %v432
    %v435 = vadd.f32 %v256, %v432
    %v436 = vadd.f32 %v288, %v432
    %v437 = vadd.f32 %v320, %v432
    %v438 = vadd.f32 %v352, %v432
    %v439 = vadd.f32 %v384, %v432
    %v440 = vadd.f32 %v416, %v432
    %vm441 = vcmask 57344
    %v442 = vsel %vm441, %v433, -inf
    %443 = vmax.xlane.f32.xlu0 %v442
    %v444 = vpop.xlane.xlu0 %443
    %v445 = vsel %vm441, %v434, -inf
    %446 = vmax.xlane.f32.xlu0 %v445
    %v447 = vpop.xlane.xlu0 %446
    %v448 = vsel %vm441, %v435, -inf
    %449 = vmax.xlane.f32.xlu0 %v448
    %v450 = vpop.xlane.xlu0 %449
    %v451 = vsel %vm441, %v436, -inf
    %452 = vmax.xlane.f32.xlu0 %v451
    %v453 = vpop.xlane.xlu0 %452
    %v454 = vsel %vm441, %v437, -inf
    %455 = vmax.xlane.f32.xlu0 %v454
    %v456 = vpop.xlane.xlu0 %455
    %v457 = vsel %vm441, %v438, -inf
    %458 = vmax.xlane.f32.xlu0 %v457
    %v459 = vpop.xlane.xlu0 %458
    %v460 = vsel %vm441, %v439, -inf
    %461 = vmax.xlane.f32.xlu0 %v460
    %v462 = vpop.xlane.xlu0 %461
    %v463 = vsel %vm441, %v440, -inf
    %464 = vmax.xlane.f32.xlu0 %v463
    %v465 = vpop.xlane.xlu0 %464
    %v466 = vsub.f32 %v433, %v444
    %v467 = vsub.f32 %v434, %v447
    %v468 = vsub.f32 %v435, %v450
    %v469 = vsub.f32 %v436, %v453
    %v470 = vsub.f32 %v437, %v456
    %v471 = vsub.f32 %v438, %v459
    %v472 = vsub.f32 %v439, %v462
    %v473 = vsub.f32 %v440, %v465
    %v474 = vmul.f32 %v466, 1.442695
    %v475 = vpow.pop %v474
    %v476 = vmul.f32 %v467, 1.442695
    %v477 = vpow.pop %v476
    %v478 = vmul.f32 %v468, 1.442695
    %v479 = vpow.pop %v478
    %v480 = vmul.f32 %v469, 1.442695
    %v481 = vpow.pop %v480
    %v482 = vmul.f32 %v470, 1.442695
    %v483 = vpow.pop %v482
    %v484 = vmul.f32 %v471, 1.442695
    %v485 = vpow.pop %v484
    %v486 = vmul.f32 %v472, 1.442695
    %v487 = vpow.pop %v486
    %v488 = vmul.f32 %v473, 1.442695
    %v489 = vpow.pop %v488
    %v490 = vsel %vm441, %v475, 0.0
    %491 = vadd.xlane.f32.xlu0 %v490
    %v492 = vpop.xlane.xlu0 %491
    %v493 = vsel %vm441, %v477, 0.0
    %494 = vadd.xlane.f32.xlu0 %v493
    %v495 = vpop.xlane.xlu0 %494
    %v496 = vsel %vm441, %v479, 0.0
    %497 = vadd.xlane.f32.xlu0 %v496
    %v498 = vpop.xlane.xlu0 %497
    %v499 = vsel %vm441, %v481, 0.0
    %500 = vadd.xlane.f32.xlu0 %v499
    %v501 = vpop.xlane.xlu0 %500
    %v502 = vsel %vm441, %v483, 0.0
    %503 = vadd.xlane.f32.xlu0 %v502
    %v504 = vpop.xlane.xlu0 %503
    %v505 = vsel %vm441, %v485, 0.0
    %506 = vadd.xlane.f32.xlu0 %v505
    %v507 = vpop.xlane.xlu0 %506
    %v508 = vsel %vm441, %v487, 0.0
    %509 = vadd.xlane.f32.xlu0 %v508
    %v510 = vpop.xlane.xlu0 %509
    %v511 = vsel %vm441, %v489, 0.0
    %512 = vadd.xlane.f32.xlu0 %v511
    %v513 = vpop.xlane.xlu0 %512
    %v514 = vrcp.pop %v492
    %v515 = vrcp.pop %v495
    %v516 = vrcp.pop %v498
    %v517 = vrcp.pop %v501
    %v518 = vrcp.pop %v504
    %v519 = vrcp.pop %v507
    %v520 = vrcp.pop %v510
    %v521 = vrcp.pop %v513
    %v522 = vmul.f32 %v492, %v514
    %v523 = vmul.f32 %v495, %v515
    %v524 = vmul.f32 %v498, %v516
    %v525 = vmul.f32 %v501, %v517
    %v526 = vmul.f32 %v504, %v518
    %v527 = vmul.f32 %v507, %v519
    %v528 = vmul.f32 %v510, %v520
    %v529 = vmul.f32 %v513, %v521
    %v530 = vsub.f32 2.0, %v522
    %v531 = vsub.f32 2.0, %v523
    %v532 = vsub.f32 2.0, %v524
    %v533 = vsub.f32 2.0, %v525
    %v534 = vsub.f32 2.0, %v526
    %v535 = vsub.f32 2.0, %v527
    %v536 = vsub.f32 2.0, %v528
    %v537 = vsub.f32 2.0, %v529
    %v538 = vmul.f32 %v514, %v530
    %v539 = vmul.f32 %v515, %v531
    %v540 = vmul.f32 %v516, %v532
    %v541 = vmul.f32 %v517, %v533
    %v542 = vmul.f32 %v518, %v534
    %v543 = vmul.f32 %v519, %v535
    %v544 = vmul.f32 %v520, %v536
    %v545 = vmul.f32 %v521, %v537
    %v546 = vmul.f32 %v475, %v538
    %v547 = vmul.f32 %v477, %v539
    %v548 = vmul.f32 %v479, %v540
    %v549 = vmul.f32 %v481, %v541
    %v550 = vmul.f32 %v483, %v542
    %v551 = vmul.f32 %v485, %v543
    %v552 = vmul.f32 %v487, %v544
    %v553 = vmul.f32 %v489, %v545
    %vm554 = vcmask 64512
    %v556 = vsel %vm554, %v546, 0
    %558 = vmatprep.subr.mxu0 0.0
    %559 = vmatpush1.msra.mxu0 %v33
    %560 = vmatprep.subr.mxu0 0.0
    %561 = vmatpush1.msra.mxu0 0.0
    %562 = vmatprep.subr.mxu0 0.0
    %563 = vmatpush1.msra.mxu0 0.0
    %564 = vmatprep.subr.mxu0 0.0
    %565 = vmatpush1.msra.mxu0 0.0
    %566 = vmatprep.subr.mxu0 0.0
    %567 = vmatpush1.msra.mxu0 0.0
    %568 = vmatprep.subr.mxu0 0.0
    %569 = vmatpush1.msra.mxu0 0.0
    %570 = vmatprep.subr.mxu0 0.0
    %571 = vmatpush1.msra.mxu0 0.0
    %572 = vmatprep.subr.mxu0 0.0
    %573 = vmatpush1.msra.mxu0 0.0
    %574 = vmatprep.subr.mxu0 0.0
    %575 = vmatpush1.msra.mxu0 0.0
    %576 = vmatprep.subr.mxu0 0.0
    %577 = vmatpush1.msra.mxu0 0.0
    %578 = vmatprep.subr.mxu0 0.0
    %579 = vmatpush1.msra.mxu0 0.0
    %580 = vmatprep.subr.mxu0 0.0
    %581 = vmatpush1.msra.mxu0 0.0
    %582 = vmatprep.subr.mxu0 0.0
    %583 = vmatpush1.msra.mxu0 0.0
    %584 = vmatprep.subr.mxu0 0.0
    %585 = vmatpush1.msra.mxu0 0.0
    %586 = vmatprep.subr.mxu0 0.0
    %587 = vmatpush1.msra.mxu0 0.0
    %588 = vmatprep.subr.mxu0 0.0
    %589 = vmatpush1.msra.mxu0 0.0
    %590 = vmatprep.subr.mxu0 0.0
    %591 = vmatpush1.msra.mxu0 0.0
    %592 = vmatprep.subr.mxu0 0.0
    %593 = vmatpush1.msra.mxu0 0.0
    %594 = vmatprep.subr.mxu0 0.0
    %595 = vmatpush1.msra.mxu0 0.0
    %596 = vmatprep.subr.mxu0 0.0
    %597 = vmatpush1.msra.mxu0 0.0
    %598 = vmatprep.subr.mxu0 0.0
    %599 = vmatpush1.msra.mxu0 0.0
    %600 = vmatprep.subr.mxu0 0.0
    %601 = vmatpush1.msra.mxu0 0.0
    %602 = vmatprep.subr.mxu0 0.0
    %603 = vmatpush1.msra.mxu0 0.0
    %604 = vmatprep.subr.mxu0 0.0
    %605 = vmatpush1.msra.mxu0 0.0
    %606 = vmatprep.subr.mxu0 0.0
    %607 = vmatpush1.msra.mxu0 0.0
    %608 = vmatprep.subr.mxu0 0.0
    %609 = vmatpush1.msra.mxu0 0.0
    %610 = vmatprep.subr.mxu0 0.0
    %611 = vmatpush1.msra.mxu0 0.0
    %612 = vmatprep.subr.mxu0 0.0
    %613 = vmatpush1.msra.mxu0 0.0
    %614 = vmatprep.subr.mxu0 0.0
    %615 = vmatpush1.msra.mxu0 0.0
    %616 = vmatprep.subr.mxu0 0.0
    %617 = vmatpush1.msra.mxu0 0.0
    %618 = vmatprep.subr.mxu0 0.0
    %619 = vmatpush1.msra.mxu0 0.0
    %620 = vmatprep.subr.mxu0 0.0
    %621 = vmatpush1.msra.mxu0 0.0
    %622 = vmatprep.mubr.f32.mxu0 0.0
    %623 = vmatmul.mubr.f32.gmra.mrb[0].mxu0 %v556
    %v624 = vpop.f32.mrb[0].mxu0
    %v625 = vadd.f32 0.0, %v624
    %v626 = vpop.f32.mrb[0].mxu0
    %627 = vdwg.mxu0
    %v629 = vsel %vm554, %v547, 0
    %631 = vmatprep.subr.mxu0 0.0
    %632 = vmatpush1.msra.mxu0 %v34
    %633 = vmatprep.subr.mxu0 0.0
    %634 = vmatpush1.msra.mxu0 0.0
    %635 = vmatprep.subr.mxu0 0.0
    %636 = vmatpush1.msra.mxu0 0.0
    %637 = vmatprep.subr.mxu0 0.0
    %638 = vmatpush1.msra.mxu0 0.0
    %639 = vmatprep.subr.mxu0 0.0
    %640 = vmatpush1.msra.mxu0 0.0
    %641 = vmatprep.subr.mxu0 0.0
    %642 = vmatpush1.msra.mxu0 0.0
    %643 = vmatprep.subr.mxu0 0.0
    %644 = vmatpush1.msra.mxu0 0.0
    %645 = vmatprep.subr.mxu0 0.0
    %646 = vmatpush1.msra.mxu0 0.0
    %647 = vmatprep.subr.mxu0 0.0
    %648 = vmatpush1.msra.mxu0 0.0
    %649 = vmatprep.subr.mxu0 0.0
    %650 = vmatpush1.msra.mxu0 0.0
    %651 = vmatprep.subr.mxu0 0.0
    %652 = vmatpush1.msra.mxu0 0.0
    %653 = vmatprep.subr.mxu0 0.0
    %654 = vmatpush1.msra.mxu0 0.0
    %655 = vmatprep.subr.mxu0 0.0
    %656 = vmatpush1.msra.mxu0 0.0
    %657 = vmatprep.subr.mxu0 0.0
    %658 = vmatpush1.msra.mxu0 0.0
    %659 = vmatprep.subr.mxu0 0.0
    %660 = vmatpush1.msra.mxu0 0.0
    %661 = vmatprep.subr.mxu0 0.0
    %662 = vmatpush1.msra.mxu0 0.0
    %663 = vmatprep.subr.mxu0 0.0
    %664 = vmatpush1.msra.mxu0 0.0
    %665 = vmatprep.subr.mxu0 0.0
    %666 = vmatpush1.msra.mxu0 0.0
    %667 = vmatprep.subr.mxu0 0.0
    %668 = vmatpush1.msra.mxu0 0.0
    %669 = vmatprep.subr.mxu0 0.0
    %670 = vmatpush1.msra.mxu0 0.0
    %671 = vmatprep.subr.mxu0 0.0
    %672 = vmatpush1.msra.mxu0 0.0
    %673 = vmatprep.subr.mxu0 0.0
    %674 = vmatpush1.msra.mxu0 0.0
    %675 = vmatprep.subr.mxu0 0.0
    %676 = vmatpush1.msra.mxu0 0.0
    %677 = vmatprep.subr.mxu0 0.0
    %678 = vmatpush1.msra.mxu0 0.0
    %679 = vmatprep.subr.mxu0 0.0
    %680 = vmatpush1.msra.mxu0 0.0
    %681 = vmatprep.subr.mxu0 0.0
    %682 = vmatpush1.msra.mxu0 0.0
    %683 = vmatprep.subr.mxu0 0.0
    %684 = vmatpush1.msra.mxu0 0.0
    %685 = vmatprep.subr.mxu0 0.0
    %686 = vmatpush1.msra.mxu0 0.0
    %687 = vmatprep.subr.mxu0 0.0
    %688 = vmatpush1.msra.mxu0 0.0
    %689 = vmatprep.subr.mxu0 0.0
    %690 = vmatpush1.msra.mxu0 0.0
    %691 = vmatprep.subr.mxu0 0.0
    %692 = vmatpush1.msra.mxu0 0.0
    %693 = vmatprep.subr.mxu0 0.0
    %694 = vmatpush1.msra.mxu0 0.0
    %695 = vmatprep.mubr.f32.mxu0 0.0
    %696 = vmatmul.mubr.f32.gmra.mrb[0].mxu0 %v629
    %v697 = vpop.f32.mrb[0].mxu0
    %v698 = vadd.f32 0.0, %v697
    %v699 = vpop.f32.mrb[0].mxu0
    %700 = vdwg.mxu0
    %v702 = vsel %vm554, %v548, 0
    %704 = vmatprep.subr.mxu0 0.0
    %705 = vmatpush1.msra.mxu0 %v35
    %706 = vmatprep.subr.mxu0 0.0
    %707 = vmatpush1.msra.mxu0 0.0
    %708 = vmatprep.subr.mxu0 0.0
    %709 = vmatpush1.msra.mxu0 0.0
    %710 = vmatprep.subr.mxu0 0.0
    %711 = vmatpush1.msra.mxu0 0.0
    %712 = vmatprep.subr.mxu0 0.0
    %713 = vmatpush1.msra.mxu0 0.0
    %714 = vmatprep.subr.mxu0 0.0
    %715 = vmatpush1.msra.mxu0 0.0
    %716 = vmatprep.subr.mxu0 0.0
    %717 = vmatpush1.msra.mxu0 0.0
    %718 = vmatprep.subr.mxu0 0.0
    %719 = vmatpush1.msra.mxu0 0.0
    %720 = vmatprep.subr.mxu0 0.0
    %721 = vmatpush1.msra.mxu0 0.0
    %722 = vmatprep.subr.mxu0 0.0
    %723 = vmatpush1.msra.mxu0 0.0
    %724 = vmatprep.subr.mxu0 0.0
    %725 = vmatpush1.msra.mxu0 0.0
    %726 = vmatprep.subr.mxu0 0.0
    %727 = vmatpush1.msra.mxu0 0.0
    %728 = vmatprep.subr.mxu0 0.0
    %729 = vmatpush1.msra.mxu0 0.0
    %730 = vmatprep.subr.mxu0 0.0
    %731 = vmatpush1.msra.mxu0 0.0
    %732 = vmatprep.subr.mxu0 0.0
    %733 = vmatpush1.msra.mxu0 0.0
    %734 = vmatprep.subr.mxu0 0.0
    %735 = vmatpush1.msra.mxu0 0.0
    %736 = vmatprep.subr.mxu0 0.0
    %737 = vmatpush1.msra.mxu0 0.0
    %738 = vmatprep.subr.mxu0 0.0
    %739 = vmatpush1.msra.mxu0 0.0
    %740 = vmatprep.subr.mxu0 0.0
    %741 = vmatpush1.msra.mxu0 0.0
    %742 = vmatprep.subr.mxu0 0.0
    %743 = vmatpush1.msra.mxu0 0.0
    %744 = vmatprep.subr.mxu0 0.0
    %745 = vmatpush1.msra.mxu0 0.0
    %746 = vmatprep.subr.mxu0 0.0
    %747 = vmatpush1.msra.mxu0 0.0
    %748 = vmatprep.subr.mxu0 0.0
    %749 = vmatpush1.msra.mxu0 0.0
    %750 = vmatprep.subr.mxu0 0.0
    %751 = vmatpush1.msra.mxu0 0.0
    %752 = vmatprep.subr.mxu0 0.0
    %753 = vmatpush1.msra.mxu0 0.0
    %754 = vmatprep.subr.mxu0 0.0
    %755 = vmatpush1.msra.mxu0 0.0
    %756 = vmatprep.subr.mxu0 0.0
    %757 = vmatpush1.msra.mxu0 0.0
    %758 = vmatprep.subr.mxu0 0.0
    %759 = vmatpush1.msra.mxu0 0.0
    %760 = vmatprep.subr.mxu0 0.0
    %761 = vmatpush1.msra.mxu0 0.0
    %762 = vmatprep.subr.mxu0 0.0
    %763 = vmatpush1.msra.mxu0 0.0
    %764 = vmatprep.subr.mxu0 0.0
    %765 = vmatpush1.msra.mxu0 0.0
    %766 = vmatprep.subr.mxu0 0.0
    %767 = vmatpush1.msra.mxu0 0.0
    %768 = vmatprep.mubr.f32.mxu0 0.0
    %769 = vmatmul.mubr.f32.gmra.mrb[0].mxu0 %v702
    %v770 = vpop.f32.mrb[0].mxu0
    %v771 = vadd.f32 0.0, %v770
    %v772 = vpop.f32.mrb[0].mxu0
    %773 = vdwg.mxu0
    %v775 = vsel %vm554, %v549, 0
    %777 = vmatprep.subr.mxu0 0.0
    %778 = vmatpush1.msra.mxu0 %v36
    %779 = vmatprep.subr.mxu0 0.0
    %780 = vmatpush1.msra.mxu0 0.0
    %781 = vmatprep.subr.mxu0 0.0
    %782 = vmatpush1.msra.mxu0 0.0
    %783 = vmatprep.subr.mxu0 0.0
    %784 = vmatpush1.msra.mxu0 0.0
    %785 = vmatprep.subr.mxu0 0.0
    %786 = vmatpush1.msra.mxu0 0.0
    %787 = vmatprep.subr.mxu0 0.0
    %788 = vmatpush1.msra.mxu0 0.0
    %789 = vmatprep.subr.mxu0 0.0
    %790 = vmatpush1.msra.mxu0 0.0
    %791 = vmatprep.subr.mxu0 0.0
    %792 = vmatpush1.msra.mxu0 0.0
    %793 = vmatprep.subr.mxu0 0.0
    %794 = vmatpush1.msra.mxu0 0.0
    %795 = vmatprep.subr.mxu0 0.0
    %796 = vmatpush1.msra.mxu0 0.0
    %797 = vmatprep.subr.mxu0 0.0
    %798 = vmatpush1.msra.mxu0 0.0
    %799 = vmatprep.subr.mxu0 0.0
    %800 = vmatpush1.msra.mxu0 0.0
    %801 = vmatprep.subr.mxu0 0.0
    %802 = vmatpush1.msra.mxu0 0.0
    %803 = vmatprep.subr.mxu0 0.0
    %804 = vmatpush1.msra.mxu0 0.0
    %805 = vmatprep.subr.mxu0 0.0
    %806 = vmatpush1.msra.mxu0 0.0
    %807 = vmatprep.subr.mxu0 0.0
    %808 = vmatpush1.msra.mxu0 0.0
    %809 = vmatprep.subr.mxu0 0.0
    %810 = vmatpush1.msra.mxu0 0.0
    %811 = vmatprep.subr.mxu0 0.0
    %812 = vmatpush1.msra.mxu0 0.0
    %813 = vmatprep.subr.mxu0 0.0
    %814 = vmatpush1.msra.mxu0 0.0
    %815 = vmatprep.subr.mxu0 0.0
    %816 = vmatpush1.msra.mxu0 0.0
    %817 = vmatprep.subr.mxu0 0.0
    %818 = vmatpush1.msra.mxu0 0.0
    %819 = vmatprep.subr.mxu0 0.0
    %820 = vmatpush1.msra.mxu0 0.0
    %821 = vmatprep.subr.mxu0 0.0
    %822 = vmatpush1.msra.mxu0 0.0
    %823 = vmatprep.subr.mxu0 0.0
    %824 = vmatpush1.msra.mxu0 0.0
    %825 = vmatprep.subr.mxu0 0.0
    %826 = vmatpush1.msra.mxu0 0.0
    %827 = vmatprep.subr.mxu0 0.0
    %828 = vmatpush1.msra.mxu0 0.0
    %829 = vmatprep.subr.mxu0 0.0
    %830 = vmatpush1.msra.mxu0 0.0
    %831 = vmatprep.subr.mxu0 0.0
    %832 = vmatpush1.msra.mxu0 0.0
    %833 = vmatprep.subr.mxu0 0.0
    %834 = vmatpush1.msra.mxu0 0.0
    %835 = vmatprep.subr.mxu0 0.0
    %836 = vmatpush1.msra.mxu0 0.0
    %837 = vmatprep.subr.mxu0 0.0
    %838 = vmatpush1.msra.mxu0 0.0
    %839 = vmatprep.subr.mxu0 0.0
    %840 = vmatpush1.msra.mxu0 0.0
    %841 = vmatprep.mubr.f32.mxu0 0.0
    %842 = vmatmul.mubr.f32.gmra.mrb[0].mxu0 %v775
    %v843 = vpop.f32.mrb[0].mxu0
    %v844 = vadd.f32 0.0, %v843
    %v845 = vpop.f32.mrb[0].mxu0
    %846 = vdwg.mxu0
    %v848 = vsel %vm554, %v550, 0
    %850 = vmatprep.subr.mxu0 0.0
    %851 = vmatpush1.msra.mxu0 %v37
    %852 = vmatprep.subr.mxu0 0.0
    %853 = vmatpush1.msra.mxu0 0.0
    %854 = vmatprep.subr.mxu0 0.0
    %855 = vmatpush1.msra.mxu0 0.0
    %856 = vmatprep.subr.mxu0 0.0
    %857 = vmatpush1.msra.mxu0 0.0
    %858 = vmatprep.subr.mxu0 0.0
    %859 = vmatpush1.msra.mxu0 0.0
    %860 = vmatprep.subr.mxu0 0.0
    %861 = vmatpush1.msra.mxu0 0.0
    %862 = vmatprep.subr.mxu0 0.0
    %863 = vmatpush1.msra.mxu0 0.0
    %864 = vmatprep.subr.mxu0 0.0
    %865 = vmatpush1.msra.mxu0 0.0
    %866 = vmatprep.subr.mxu0 0.0
    %867 = vmatpush1.msra.mxu0 0.0
    %868 = vmatprep.subr.mxu0 0.0
    %869 = vmatpush1.msra.mxu0 0.0
    %870 = vmatprep.subr.mxu0 0.0
    %871 = vmatpush1.msra.mxu0 0.0
    %872 = vmatprep.subr.mxu0 0.0
    %873 = vmatpush1.msra.mxu0 0.0
    %874 = vmatprep.subr.mxu0 0.0
    %875 = vmatpush1.msra.mxu0 0.0
    %876 = vmatprep.subr.mxu0 0.0
    %877 = vmatpush1.msra.mxu0 0.0
    %878 = vmatprep.subr.mxu0 0.0
    %879 = vmatpush1.msra.mxu0 0.0
    %880 = vmatprep.subr.mxu0 0.0
    %881 = vmatpush1.msra.mxu0 0.0
    %882 = vmatprep.subr.mxu0 0.0
    %883 = vmatpush1.msra.mxu0 0.0
    %884 = vmatprep.subr.mxu0 0.0
    %885 = vmatpush1.msra.mxu0 0.0
    %886 = vmatprep.subr.mxu0 0.0
    %887 = vmatpush1.msra.mxu0 0.0
    %888 = vmatprep.subr.mxu0 0.0
    %889 = vmatpush1.msra.mxu0 0.0
    %890 = vmatprep.subr.mxu0 0.0
    %891 = vmatpush1.msra.mxu0 0.0
    %892 = vmatprep.subr.mxu0 0.0
    %893 = vmatpush1.msra.mxu0 0.0
    %894 = vmatprep.subr.mxu0 0.0
    %895 = vmatpush1.msra.mxu0 0.0
    %896 = vmatprep.subr.mxu0 0.0
    %897 = vmatpush1.msra.mxu0 0.0
    %898 = vmatprep.subr.mxu0 0.0
    %899 = vmatpush1.msra.mxu0 0.0
    %900 = vmatprep.subr.mxu0 0.0
    %901 = vmatpush1.msra.mxu0 0.0
    %902 = vmatprep.subr.mxu0 0.0
    %903 = vmatpush1.msra.mxu0 0.0
    %904 = vmatprep.subr.mxu0 0.0
    %905 = vmatpush1.msra.mxu0 0.0
    %906 = vmatprep.subr.mxu0 0.0
    %907 = vmatpush1.msra.mxu0 0.0
    %908 = vmatprep.subr.mxu0 0.0
    %909 = vmatpush1.msra.mxu0 0.0
    %910 = vmatprep.subr.mxu0 0.0
    %911 = vmatpush1.msra.mxu0 0.0
    %912 = vmatprep.subr.mxu0 0.0
    %913 = vmatpush1.msra.mxu0 0.0
    %914 = vmatprep.mubr.f32.mxu0 0.0
    %915 = vmatmul.mubr.f32.gmra.mrb[0].mxu0 %v848
    %v916 = vpop.f32.mrb[0].mxu0
    %v917 = vadd.f32 0.0, %v916
    %v918 = vpop.f32.mrb[0].mxu0
    %919 = vdwg.mxu0
    %v921 = vsel %vm554, %v551, 0
    %923 = vmatprep.subr.mxu0 0.0
    %924 = vmatpush1.msra.mxu0 %v38
    %925 = vmatprep.subr.mxu0 0.0
    %926 = vmatpush1.msra.mxu0 0.0
    %927 = vmatprep.subr.mxu0 0.0
    %928 = vmatpush1.msra.mxu0 0.0
    %929 = vmatprep.subr.mxu0 0.0
    %930 = vmatpush1.msra.mxu0 0.0
    %931 = vmatprep.subr.mxu0 0.0
    %932 = vmatpush1.msra.mxu0 0.0
    %933 = vmatprep.subr.mxu0 0.0
    %934 = vmatpush1.msra.mxu0 0.0
    %935 = vmatprep.subr.mxu0 0.0
    %936 = vmatpush1.msra.mxu0 0.0
    %937 = vmatprep.subr.mxu0 0.0
    %938 = vmatpush1.msra.mxu0 0.0
    %939 = vmatprep.subr.mxu0 0.0
    %940 = vmatpush1.msra.mxu0 0.0
    %941 = vmatprep.subr.mxu0 0.0
    %942 = vmatpush1.msra.mxu0 0.0
    %943 = vmatprep.subr.mxu0 0.0
    %944 = vmatpush1.msra.mxu0 0.0
    %945 = vmatprep.subr.mxu0 0.0
    %946 = vmatpush1.msra.mxu0 0.0
    %947 = vmatprep.subr.mxu0 0.0
    %948 = vmatpush1.msra.mxu0 0.0
    %949 = vmatprep.subr.mxu0 0.0
    %950 = vmatpush1.msra.mxu0 0.0
    %951 = vmatprep.subr.mxu0 0.0
    %952 = vmatpush1.msra.mxu0 0.0
    %953 = vmatprep.subr.mxu0 0.0
    %954 = vmatpush1.msra.mxu0 0.0
    %955 = vmatprep.subr.mxu0 0.0
    %956 = vmatpush1.msra.mxu0 0.0
    %957 = vmatprep.subr.mxu0 0.0
    %958 = vmatpush1.msra.mxu0 0.0
    %959 = vmatprep.subr.mxu0 0.0
    %960 = vmatpush1.msra.mxu0 0.0
    %961 = vmatprep.subr.mxu0 0.0
    %962 = vmatpush1.msra.mxu0 0.0
    %963 = vmatprep.subr.mxu0 0.0
    %964 = vmatpush1.msra.mxu0 0.0
    %965 = vmatprep.subr.mxu0 0.0
    %966 = vmatpush1.msra.mxu0 0.0
    %967 = vmatprep.subr.mxu0 0.0
    %968 = vmatpush1.msra.mxu0 0.0
    %969 = vmatprep.subr.mxu0 0.0
    %970 = vmatpush1.msra.mxu0 0.0
    %971 = vmatprep.subr.mxu0 0.0
    %972 = vmatpush1.msra.mxu0 0.0
    %973 = vmatprep.subr.mxu0 0.0
    %974 = vmatpush1.msra.mxu0 0.0
    %975 = vmatprep.subr.mxu0 0.0
    %976 = vmatpush1.msra.mxu0 0.0
    %977 = vmatprep.subr.mxu0 0.0
    %978 = vmatpush1.msra.mxu0 0.0
    %979 = vmatprep.subr.mxu0 0.0
    %980 = vmatpush1.msra.mxu0 0.0
    %981 = vmatprep.subr.mxu0 0.0
    %982 = vmatpush1.msra.mxu0 0.0
    %983 = vmatprep.subr.mxu0 0.0
    %984 = vmatpush1.msra.mxu0 0.0
    %985 = vmatprep.subr.mxu0 0.0
    %986 = vmatpush1.msra.mxu0 0.0
    %987 = vmatprep.mubr.f32.mxu0 0.0
    %988 = vmatmul.mubr.f32.gmra.mrb[0].mxu0 %v921
    %v989 = vpop.f32.mrb[0].mxu0
    %v990 = vadd.f32 0.0, %v989
    %v991 = vpop.f32.mrb[0].mxu0
    %992 = vdwg.mxu0
    %v994 = vsel %vm554, %v552, 0
    %996 = vmatprep.subr.mxu0 0.0
    %997 = vmatpush1.msra.mxu0 %v39
    %998 = vmatprep.subr.mxu0 0.0
    %999 = vmatpush1.msra.mxu0 0.0
    %1000 = vmatprep.subr.mxu0 0.0
    %1001 = vmatpush1.msra.mxu0 0.0
    %1002 = vmatprep.subr.mxu0 0.0
    %1003 = vmatpush1.msra.mxu0 0.0
    %1004 = vmatprep.subr.mxu0 0.0
    %1005 = vmatpush1.msra.mxu0 0.0
    %1006 = vmatprep.subr.mxu0 0.0
    %1007 = vmatpush1.msra.mxu0 0.0
    %1008 = vmatprep.subr.mxu0 0.0
    %1009 = vmatpush1.msra.mxu0 0.0
    %1010 = vmatprep.subr.mxu0 0.0
    %1011 = vmatpush1.msra.mxu0 0.0
    %1012 = vmatprep.subr.mxu0 0.0
    %1013 = vmatpush1.msra.mxu0 0.0
    %1014 = vmatprep.subr.mxu0 0.0
    %1015 = vmatpush1.msra.mxu0 0.0
    %1016 = vmatprep.subr.mxu0 0.0
    %1017 = vmatpush1.msra.mxu0 0.0
    %1018 = vmatprep.subr.mxu0 0.0
    %1019 = vmatpush1.msra.mxu0 0.0
    %1020 = vmatprep.subr.mxu0 0.0
    %1021 = vmatpush1.msra.mxu0 0.0
    %1022 = vmatprep.subr.mxu0 0.0
    %1023 = vmatpush1.msra.mxu0 0.0
    %1024 = vmatprep.subr.mxu0 0.0
    %1025 = vmatpush1.msra.mxu0 0.0
    %1026 = vmatprep.subr.mxu0 0.0
    %1027 = vmatpush1.msra.mxu0 0.0
    %1028 = vmatprep.subr.mxu0 0.0
    %1029 = vmatpush1.msra.mxu0 0.0
    %1030 = vmatprep.subr.mxu0 0.0
    %1031 = vmatpush1.msra.mxu0 0.0
    %1032 = vmatprep.subr.mxu0 0.0
    %1033 = vmatpush1.msra.mxu0 0.0
    %1034 = vmatprep.subr.mxu0 0.0
    %1035 = vmatpush1.msra.mxu0 0.0
    %1036 = vmatprep.subr.mxu0 0.0
    %1037 = vmatpush1.msra.mxu0 0.0
    %1038 = vmatprep.subr.mxu0 0.0
    %1039 = vmatpush1.msra.mxu0 0.0
    %1040 = vmatprep.subr.mxu0 0.0
    %1041 = vmatpush1.msra.mxu0 0.0
    %1042 = vmatprep.subr.mxu0 0.0
    %1043 = vmatpush1.msra.mxu0 0.0
    %1044 = vmatprep.subr.mxu0 0.0
    %1045 = vmatpush1.msra.mxu0 0.0
    %1046 = vmatprep.subr.mxu0 0.0
    %1047 = vmatpush1.msra.mxu0 0.0
    %1048 = vmatprep.subr.mxu0 0.0
    %1049 = vmatpush1.msra.mxu0 0.0
    %1050 = vmatprep.subr.mxu0 0.0
    %1051 = vmatpush1.msra.mxu0 0.0
    %1052 = vmatprep.subr.mxu0 0.0
    %1053 = vmatpush1.msra.mxu0 0.0
    %1054 = vmatprep.subr.mxu0 0.0
    %1055 = vmatpush1.msra.mxu0 0.0
    %1056 = vmatprep.subr.mxu0 0.0
    %1057 = vmatpush1.msra.mxu0 0.0
    %1058 = vmatprep.subr.mxu0 0.0
    %1059 = vmatpush1.msra.mxu0 0.0
    %1060 = vmatprep.mubr.f32.mxu0 0.0
    %1061 = vmatmul.mubr.f32.gmra.mrb[0].mxu0 %v994
    %v1062 = vpop.f32.mrb[0].mxu0
    %v1063 = vadd.f32 0.0, %v1062
    %v1064 = vpop.f32.mrb[0].mxu0
    %1065 = vdwg.mxu0
    %v1067 = vsel %vm554, %v553, 0
    %1069 = vmatprep.subr.mxu0 0.0
    %1070 = vmatpush1.msra.mxu0 %v40
    %1071 = vmatprep.subr.mxu0 0.0
    %1072 = vmatpush1.msra.mxu0 0.0
    %1073 = vmatprep.subr.mxu0 0.0
    %1074 = vmatpush1.msra.mxu0 0.0
    %1075 = vmatprep.subr.mxu0 0.0
    %1076 = vmatpush1.msra.mxu0 0.0
    %1077 = vmatprep.subr.mxu0 0.0
    %1078 = vmatpush1.msra.mxu0 0.0
    %1079 = vmatprep.subr.mxu0 0.0
    %1080 = vmatpush1.msra.mxu0 0.0
    %1081 = vmatprep.subr.mxu0 0.0
    %1082 = vmatpush1.msra.mxu0 0.0
    %1083 = vmatprep.subr.mxu0 0.0
    %1084 = vmatpush1.msra.mxu0 0.0
    %1085 = vmatprep.subr.mxu0 0.0
    %1086 = vmatpush1.msra.mxu0 0.0
    %1087 = vmatprep.subr.mxu0 0.0
    %1088 = vmatpush1.msra.mxu0 0.0
    %1089 = vmatprep.subr.mxu0 0.0
    %1090 = vmatpush1.msra.mxu0 0.0
    %1091 = vmatprep.subr.mxu0 0.0
    %1092 = vmatpush1.msra.mxu0 0.0
    %1093 = vmatprep.subr.mxu0 0.0
    %1094 = vmatpush1.msra.mxu0 0.0
    %1095 = vmatprep.subr.mxu0 0.0
    %1096 = vmatpush1.msra.mxu0 0.0
    %1097 = vmatprep.subr.mxu0 0.0
    %1098 = vmatpush1.msra.mxu0 0.0
    %1099 = vmatprep.subr.mxu0 0.0
    %1100 = vmatpush1.msra.mxu0 0.0
    %1101 = vmatprep.subr.mxu0 0.0
    %1102 = vmatpush1.msra.mxu0 0.0
    %1103 = vmatprep.subr.mxu0 0.0
    %1104 = vmatpush1.msra.mxu0 0.0
    %1105 = vmatprep.subr.mxu0 0.0
    %1106 = vmatpush1.msra.mxu0 0.0
    %1107 = vmatprep.subr.mxu0 0.0
    %1108 = vmatpush1.msra.mxu0 0.0
    %1109 = vmatprep.subr.mxu0 0.0
    %1110 = vmatpush1.msra.mxu0 0.0
    %1111 = vmatprep.subr.mxu0 0.0
    %1112 = vmatpush1.msra.mxu0 0.0
    %1113 = vmatprep.subr.mxu0 0.0
    %1114 = vmatpush1.msra.mxu0 0.0
    %1115 = vmatprep.subr.mxu0 0.0
    %1116 = vmatpush1.msra.mxu0 0.0
    %1117 = vmatprep.subr.mxu0 0.0
    %1118 = vmatpush1.msra.mxu0 0.0
    %1119 = vmatprep.subr.mxu0 0.0
    %1120 = vmatpush1.msra.mxu0 0.0
    %1121 = vmatprep.subr.mxu0 0.0
    %1122 = vmatpush1.msra.mxu0 0.0
    %1123 = vmatprep.subr.mxu0 0.0
    %1124 = vmatpush1.msra.mxu0 0.0
    %1125 = vmatprep.subr.mxu0 0.0
    %1126 = vmatpush1.msra.mxu0 0.0
    %1127 = vmatprep.subr.mxu0 0.0
    %1128 = vmatpush1.msra.mxu0 0.0
    %1129 = vmatprep.subr.mxu0 0.0
    %1130 = vmatpush1.msra.mxu0 0.0
    %1131 = vmatprep.subr.mxu0 0.0
    %1132 = vmatpush1.msra.mxu0 0.0
    %1133 = vmatprep.mubr.f32.mxu0 0.0
    %1134 = vmatmul.mubr.f32.gmra.mrb[0].mxu0 %v1067
    %v1135 = vpop.f32.mrb[0].mxu0
    %v1136 = vadd.f32 0.0, %v1135
    %v1137 = vpop.f32.mrb[0].mxu0
    %1138 = vdwg.mxu0
    %v1147 = vrot.slane %v698, 7
    %vm1148 = vcmask 1041409
    %v1149 = vsel %vm1148, %v1147, %v625
    %v1150 = vrot.slane %v771, 6
    %vm1151 = vcmask 1042434
    %v1152 = vsel %vm1151, %v1150, %v1149
    %v1153 = vrot.slane %v844, 5
    %vm1154 = vcmask 1043459
    %v1155 = vsel %vm1154, %v1153, %v1152
    %v1156 = vrot.slane %v917, 4
    %vm1157 = vcmask 1044484
    %v1158 = vsel %vm1157, %v1156, %v1155
    %v1159 = vrot.slane %v990, 3
    %vm1160 = vcmask 1045509
    %v1161 = vsel %vm1160, %v1159, %v1158
    %v1162 = vrot.slane %v1063, 2
    %vm1163 = vcmask 1046534
    %v1164 = vsel %vm1163, %v1162, %v1161
    %v1165 = vrot.slane %v1136, 1
    %vm1166 = vcmask 1047559
    %v1167 = vsel %vm1166, %v1165, %v1164
    %1169 = vst.msk [vmem:[#allocation6] sm:$0xff] %vm46, %v1167
    %v1170 = vrot.slane %v547, 7
    %v1171 = vsel %vm1148, %v1170, %v546
    %v1172 = vrot.slane %v548, 6
    %v1173 = vsel %vm1151, %v1172, %v1171
    %v1174 = vrot.slane %v549, 5
    %v1175 = vsel %vm1154, %v1174, %v1173
    %v1176 = vrot.slane %v550, 4
    %v1177 = vsel %vm1157, %v1176, %v1175
    %v1178 = vrot.slane %v551, 3
    %v1179 = vsel %vm1160, %v1178, %v1177
    %v1180 = vrot.slane %v552, 2
    %v1181 = vsel %vm1163, %v1180, %v1179
    %v1182 = vrot.slane %v553, 1
    %v1183 = vsel %vm1166, %v1182, %v1181
    %1185 = vst.msk [vmem:[#allocation7] sm:$0xff] %vm554, %v1183
    // Predicated region
    $region18: #{tpu_custom_call.1} parent=1 // pred_check
      _
    $region19: #{tpu_custom_call.1} parent=1 // pred_check_branch
      %1187 = sbr.rel (0) target = $region21
    $region20: #{tpu_custom_call.1} parent=1 // pred_region
      %s1189 = ssub.s32 128, 128
      %1190 = vsyncadd [#allocation5], %s1189
      %s1192 = sshll.u32 [#allocation6], 4
      %s1193 = int_to_ptr.vmem [resolvable:$true] %s1192
      %1195 = dma.vmem_to_hbm [thread:$0]  %s1193, 128, %s3, [#allocation5]
    $region21: #{tpu_custom_call.1} parent=1 // pred_fallthru
      _
    // Predicated region
    $region22: #{tpu_custom_call.1} parent=1 // pred_check
      _
    $region23: #{tpu_custom_call.1} parent=1 // pred_check_branch
      %1197 = sbr.rel (0) target = $region25
    $region24: #{tpu_custom_call.1} parent=1 // pred_region
      %s1199 = ssub.s32 128, 128
      %1200 = vsyncadd [#allocation8], %s1199
      %s1202 = sshll.u32 [#allocation7], 4
      %s1203 = int_to_ptr.vmem [resolvable:$true] %s1202
      %1205 = dma.vmem_to_hbm [thread:$0]  %s1203, 128, %s4, [#allocation8]
    $region25: #{tpu_custom_call.1} parent=1 // pred_fallthru
      _
    // Predicated region
    $region26: #{tpu_custom_call.1} parent=1 // pred_check
      _
    $region27: #{tpu_custom_call.1} parent=1 // pred_check_branch
      %1207 = sbr.rel (0) target = $region29
    $region28: #{tpu_custom_call.1} parent=1 // pred_region
      %1208 = dma.done [#allocation5], 128
    $region29: #{tpu_custom_call.1} parent=1 // pred_fallthru
      _
    // Predicated region
    $region30: #{tpu_custom_call.1} parent=1 // pred_check
      _
    $region31: #{tpu_custom_call.1} parent=1 // pred_check_branch
      %1210 = sbr.rel (0) target = $region33
    $region32: #{tpu_custom_call.1} parent=1 // pred_region
      %1211 = dma.done [#allocation8], 128
    $region33: #{tpu_custom_call.1} parent=1 // pred_fallthru
      _
    %1212 = vsyncpa [#allocation4], 1
    %1213 = vsyncpa [#allocation5], 1
    %1214 = vsyncpa [#allocation8], 1

</llo_original>
